<compile_context>
chip_gen: v7x
topology: tpu7x:2x2x1
jax: 0.10.0
libtpu: 0.0.40
codegen_flags: <defaults>
</compile_context>

<pallas_src>
import jax
import jax.numpy as jnp
from jax.experimental import pallas as pl
from jax.experimental.pallas import tpu as pltpu

IN1, IN2, IN3 = 10, 2, 8     # feature widths of x1, x2, x3 (concat -> 20)
HID = 16
OUT_DIM = 7


def _mynetwork_kernel(x1_ref, x2_ref, x3_ref,
                      w1a_ref, w1b_ref, w1c_ref, b1_ref,
                      w2_ref, b2_ref, out_ref):
    # concat([x1, x2, x3], -1) @ w1 expressed as three MXU matmuls summed
    # (w1 pre-split by row blocks) -> zero cross-lane/XLU traffic in-kernel.
    h = jnp.dot(x1_ref[...], w1a_ref[...], preferred_element_type=jnp.float32)
    h = h + jnp.dot(x2_ref[...], w1b_ref[...], preferred_element_type=jnp.float32)
    h = h + jnp.dot(x3_ref[...], w1c_ref[...], preferred_element_type=jnp.float32)
    h = jnp.maximum(h + b1_ref[...], 0.0)                        # f32 epilogue

    # Layer 2: (TB,16) @ (16,7) + (1,7) -> narrow (7-wide) store; masked vst
    # is free here because HBM bytes, not the store slot, is the bottleneck.
    y = jnp.dot(h, w2_ref[...], preferred_element_type=jnp.float32) + b2_ref[...]
    out_ref[...] = y.astype(out_ref.dtype)


def prepare_params(params):
    """One-time prep: split w1 into the three per-input row blocks."""
    w1, b1, w2, b2 = params
    w1a = w1[:IN1]
    w1b = w1[IN1:IN1 + IN2]
    w1c = w1[IN1 + IN2:]
    return w1a, w1b, w1c, b1, w2, b2


def mynetwork_forward(x1, x2, x3, prepared):
    """Returns (decoder(fusion(x1, x2, x3)), x3) — same semantics as MyNetwork."""
    w1a, w1b, w1c, b1, w2, b2 = prepared
    B = x1.shape[0]

    # Batch-tile selection, no input padding copies:
    #  * B < 1024: one block spanning the full batch dim (block dim == array
    #    dim, so any B is legal; no masking, no OOB rows).
    #  * B >= 1024: tiles of up to 2048 rows (multiple of 8), but at least two
    #    grid steps so v7x's two TensorCores both get work; a partial last
    #    block is read/write-masked by Pallas.
    if B < 1024:
        TB = B
    else:
        half = -(-B // 2)
        TB = min(2048, -(-half // 8) * 8)
    grid = (pl.cdiv(B, TB),)

    def x_spec(f):
        return pl.BlockSpec((TB, f), lambda i: (i, 0))

    def resident(r, c):
        # Same block every grid step -> weights/biases stay resident in VMEM.
        return pl.BlockSpec((r, c), lambda i: (0, 0))

    y = pl.pallas_call(
        _mynetwork_kernel,
        out_shape=jax.ShapeDtypeStruct((B, OUT_DIM), jnp.float32),
        grid=grid,
        in_specs=[
            x_spec(IN1), x_spec(IN2), x_spec(IN3),
            resident(IN1, HID), resident(IN2, HID), resident(IN3, HID),
            resident(1, HID),
            resident(HID, OUT_DIM), resident(1, OUT_DIM),
        ],
        out_specs=pl.BlockSpec((TB, OUT_DIM), lambda i: (i, 0)),
        compiler_params=pltpu.CompilerParams(
            dimension_semantics=("parallel",),   # shard batch across TCs (v7x)
        ),
    )(x1, x2, x3, w1a, w1b, w1c, b1, w2, b2)

    return y, x3


def init_params(key):
    """Deterministic init of the BetaMLP parameters: 20 -> 16 -> 7."""
    k1, k2, k3, k4 = jax.random.split(key, 4)

    def lin(kw, kb, fan_in, fan_out):
        bound = 1.0 / jnp.sqrt(fan_in)
        w = jax.random.uniform(kw, (fan_in, fan_out), jnp.float32, -bound, bound)
        b = jax.random.uniform(kb, (1, fan_out), jnp.float32, -bound, bound)
        return w, b

    w1, b1 = lin(k1, k2, IN1 + IN2 + IN3, HID)
    w2, b2 = lin(k3, k4, HID, OUT_DIM)
    return w1, b1, w2, b2


if __name__ == "__main__":
    key = jax.random.PRNGKey(0)
    kp, k1, k2, k3 = jax.random.split(key, 4)

    params = init_params(kp)
    prepared = prepare_params(params)          # one-time weight split

    batch = 2
    x1 = jax.random.normal(k1, (batch, IN1), jnp.float32)
    x2 = jax.random.normal(k2, (batch, IN2), jnp.float32)
    x3 = jax.random.normal(k3, (batch, IN3), jnp.float32)

    y, x3_out = mynetwork_forward(x1, x2, x3, prepared)
    jax.block_until_ready((y, x3_out))

    assert y.shape == (batch, OUT_DIM)
    assert x3_out.shape == (batch, IN3)

    # Reference check in plain JAX (same math as the PyTorch module).
    w1, b1, w2, b2 = params
    ref = jnp.maximum(jnp.concatenate([x1, x2, x3], -1) @ w1 + b1, 0.0) @ w2 + b2
    assert jnp.allclose(y, ref, atol=1e-5, rtol=1e-5)
    assert jnp.array_equal(x3_out, x3)

    print("KERNEL_OK")
</pallas_src>

<mosaic_0001>
module attributes {stable_mosaic.version = 11 : i64} {
  func.func @_mynetwork_kernel(%arg0: i32, %arg1: memref<2x10xf32, #tpu.memory_space<vmem>>, %arg2: memref<2x2xf32, #tpu.memory_space<vmem>>, %arg3: memref<2x8xf32, #tpu.memory_space<vmem>>, %arg4: memref<10x16xf32, #tpu.memory_space<vmem>>, %arg5: memref<2x16xf32, #tpu.memory_space<vmem>>, %arg6: memref<8x16xf32, #tpu.memory_space<vmem>>, %arg7: memref<1x16xf32, #tpu.memory_space<vmem>>, %arg8: memref<16x7xf32, #tpu.memory_space<vmem>>, %arg9: memref<1x7xf32, #tpu.memory_space<vmem>>, %arg10: memref<2x7xf32, #tpu.memory_space<vmem>>) attributes {dimension_semantics = [#tpu.dimension_semantics<parallel>], iteration_bounds = array<i64: 1>, scalar_prefetch = 0 : i64, scratch_operands = 0 : i64, tpu.core_type = #tpu.core_type<tc>, window_params = [{transform_indices = @transform_0, window_bounds = array<i64: 2, 10>}, {transform_indices = @transform_1, window_bounds = array<i64: 2, 2>}, {transform_indices = @transform_2, window_bounds = array<i64: 2, 8>}, {pipeline_mode = #tpu.pipeline_mode<synchronous>, transform_indices = @transform_3, window_bounds = array<i64: 10, 16>}, {pipeline_mode = #tpu.pipeline_mode<synchronous>, transform_indices = @transform_4, window_bounds = array<i64: 2, 16>}, {pipeline_mode = #tpu.pipeline_mode<synchronous>, transform_indices = @transform_5, window_bounds = array<i64: 8, 16>}, {pipeline_mode = #tpu.pipeline_mode<synchronous>, transform_indices = @transform_6, window_bounds = array<i64: 1, 16>}, {pipeline_mode = #tpu.pipeline_mode<synchronous>, transform_indices = @transform_7, window_bounds = array<i64: 16, 7>}, {pipeline_mode = #tpu.pipeline_mode<synchronous>, transform_indices = @transform_8, window_bounds = array<i64: 1, 7>}, {transform_indices = @transform_9, window_bounds = array<i64: 2, 7>}]} {
    %c0 = arith.constant 0 : index
    %c0_0 = arith.constant 0 : index
    %0 = vector.load %arg1[%c0, %c0_0] : memref<2x10xf32, #tpu.memory_space<vmem>>, vector<2x10xf32>
    %c0_1 = arith.constant 0 : index
    %c0_2 = arith.constant 0 : index
    %1 = vector.load %arg4[%c0_1, %c0_2] : memref<10x16xf32, #tpu.memory_space<vmem>>, vector<10x16xf32>
    %cst = arith.constant dense<0.000000e+00> : vector<2x16xf32>
    %2 = tpu.matmul %0, %1, %cst {dimension_numbers = #tpu.dot_dimension_numbers<[1], [0], [0], [1], [0, 0, 1, 1], [], []>} : vector<2x10xf32>, vector<10x16xf32>, vector<2x16xf32> -> vector<2x16xf32>
    %c0_3 = arith.constant 0 : index
    %c0_4 = arith.constant 0 : index
    %3 = vector.load %arg2[%c0_3, %c0_4] : memref<2x2xf32, #tpu.memory_space<vmem>>, vector<2x2xf32>
    %c0_5 = arith.constant 0 : index
    %c0_6 = arith.constant 0 : index
    %4 = vector.load %arg5[%c0_5, %c0_6] : memref<2x16xf32, #tpu.memory_space<vmem>>, vector<2x16xf32>
    %cst_7 = arith.constant dense<0.000000e+00> : vector<2x16xf32>
    %5 = tpu.matmul %3, %4, %cst_7 {dimension_numbers = #tpu.dot_dimension_numbers<[1], [0], [0], [1], [0, 0, 1, 1], [], []>} : vector<2x2xf32>, vector<2x16xf32>, vector<2x16xf32> -> vector<2x16xf32>
    %6 = arith.addf %2, %5 : vector<2x16xf32>
    %c0_8 = arith.constant 0 : index
    %c0_9 = arith.constant 0 : index
    %7 = vector.load %arg3[%c0_8, %c0_9] : memref<2x8xf32, #tpu.memory_space<vmem>>, vector<2x8xf32>
    %c0_10 = arith.constant 0 : index
    %c0_11 = arith.constant 0 : index
    %8 = vector.load %arg6[%c0_10, %c0_11] : memref<8x16xf32, #tpu.memory_space<vmem>>, vector<8x16xf32>
    %cst_12 = arith.constant dense<0.000000e+00> : vector<2x16xf32>
    %9 = tpu.matmul %7, %8, %cst_12 {dimension_numbers = #tpu.dot_dimension_numbers<[1], [0], [0], [1], [0, 0, 1, 1], [], []>} : vector<2x8xf32>, vector<8x16xf32>, vector<2x16xf32> -> vector<2x16xf32>
    %10 = arith.addf %6, %9 : vector<2x16xf32>
    %c0_13 = arith.constant 0 : index
    %c0_14 = arith.constant 0 : index
    %11 = vector.load %arg7[%c0_13, %c0_14] : memref<1x16xf32, #tpu.memory_space<vmem>>, vector<1x16xf32>
    %12 = vector.broadcast %11 : vector<1x16xf32> to vector<2x16xf32>
    %13 = arith.addf %10, %12 : vector<2x16xf32>
    %cst_15 = arith.constant 0.000000e+00 : f32
    %14 = vector.broadcast %cst_15 : f32 to vector<2x16xf32>
    %15 = arith.maximumf %13, %14 : vector<2x16xf32>
    %c0_16 = arith.constant 0 : index
    %c0_17 = arith.constant 0 : index
    %16 = vector.load %arg8[%c0_16, %c0_17] : memref<16x7xf32, #tpu.memory_space<vmem>>, vector<16x7xf32>
    %cst_18 = arith.constant dense<0.000000e+00> : vector<2x7xf32>
    %17 = tpu.matmul %15, %16, %cst_18 {dimension_numbers = #tpu.dot_dimension_numbers<[1], [0], [0], [1], [0, 0, 1, 1], [], []>} : vector<2x16xf32>, vector<16x7xf32>, vector<2x7xf32> -> vector<2x7xf32>
    %c0_19 = arith.constant 0 : index
    %c0_20 = arith.constant 0 : index
    %18 = vector.load %arg9[%c0_19, %c0_20] : memref<1x7xf32, #tpu.memory_space<vmem>>, vector<1x7xf32>
    %19 = vector.broadcast %18 : vector<1x7xf32> to vector<2x7xf32>
    %20 = arith.addf %17, %19 : vector<2x7xf32>
    %c0_21 = arith.constant 0 : index
    %c0_22 = arith.constant 0 : index
    %21 = vector.load %arg10[%c0_21, %c0_22] : memref<2x7xf32, #tpu.memory_space<vmem>>, vector<2x7xf32>
    tpu.vector_store %arg10[%c0_21, %c0_22], %20 {strides = array<i32>} : memref<2x7xf32, #tpu.memory_space<vmem>>, vector<2x7xf32>,
    return
  }
  func.func @transform_0(%arg0: i32) -> (i32, i32) {
    %c0_i32 = arith.constant 0 : i32
    %c0_i32_0 = arith.constant 0 : i32
    return %arg0, %c0_i32 : i32, i32
  }
  func.func @transform_1(%arg0: i32) -> (i32, i32) {
    %c0_i32 = arith.constant 0 : i32
    %c0_i32_0 = arith.constant 0 : i32
    return %arg0, %c0_i32 : i32, i32
  }
  func.func @transform_2(%arg0: i32) -> (i32, i32) {
    %c0_i32 = arith.constant 0 : i32
    %c0_i32_0 = arith.constant 0 : i32
    return %arg0, %c0_i32 : i32, i32
  }
  func.func @transform_3(%arg0: i32) -> (i32, i32) {
    %c0_i32 = arith.constant 0 : i32
    %c0_i32_0 = arith.constant 0 : i32
    %c0_i32_1 = arith.constant 0 : i32
    return %c0_i32, %c0_i32_0 : i32, i32
  }
  func.func @transform_4(%arg0: i32) -> (i32, i32) {
    %c0_i32 = arith.constant 0 : i32
    %c0_i32_0 = arith.constant 0 : i32
    %c0_i32_1 = arith.constant 0 : i32
    return %c0_i32, %c0_i32_0 : i32, i32
  }
  func.func @transform_5(%arg0: i32) -> (i32, i32) {
    %c0_i32 = arith.constant 0 : i32
    %c0_i32_0 = arith.constant 0 : i32
    %c0_i32_1 = arith.constant 0 : i32
    return %c0_i32, %c0_i32_0 : i32, i32
  }
  func.func @transform_6(%arg0: i32) -> (i32, i32) {
    %c0_i32 = arith.constant 0 : i32
    %c0_i32_0 = arith.constant 0 : i32
    %c0_i32_1 = arith.constant 0 : i32
    return %c0_i32, %c0_i32_0 : i32, i32
  }
  func.func @transform_7(%arg0: i32) -> (i32, i32) {
    %c0_i32 = arith.constant 0 : i32
    %c0_i32_0 = arith.constant 0 : i32
    %c0_i32_1 = arith.constant 0 : i32
    return %c0_i32, %c0_i32_0 : i32, i32
  }
  func.func @transform_8(%arg0: i32) -> (i32, i32) {
    %c0_i32 = arith.constant 0 : i32
    %c0_i32_0 = arith.constant 0 : i32
    %c0_i32_1 = arith.constant 0 : i32
    return %c0_i32, %c0_i32_0 : i32, i32
  }
  func.func @transform_9(%arg0: i32) -> (i32, i32) {
    %c0_i32 = arith.constant 0 : i32
    %c0_i32_0 = arith.constant 0 : i32
    return %arg0, %c0_i32 : i32, i32
  }
}

</mosaic_0001>

<llo_original>
// kernel: tpu_custom_call.1
$region0: #{tpu_custom_call.1}
  #allocation0 [shape = 'u32[]', space=smem, size = 0x4, offset = 0x4, fixed_abs, tag = 'smem constant byte address 0x4 - core index']
  #allocation1 [shape = 'u32[144,128]{1,0:T(1,128)}', space=vmem, size = 0x12000, scoped, tag = 'internal scratch']
  %s0 = inlined_call_operand.vmem [shape: f32[2,10], index: 0, kind: input, shape index: {}]
  %s1 = inlined_call_operand.vmem [shape: f32[2,2], index: 1, kind: input, shape index: {}]
  %s2 = inlined_call_operand.vmem [shape: f32[2,8], index: 2, kind: input, shape index: {}]
  %s3 = inlined_call_operand.vmem [shape: f32[10,16], index: 3, kind: input, shape index: {}]
  %s4 = inlined_call_operand.hbm [shape: f32[2,16], index: 4, kind: input, shape index: {}]
  %s5 = inlined_call_operand.vmem [shape: f32[8,16], index: 5, kind: input, shape index: {}]
  %s6 = inlined_call_operand.vmem [shape: f32[1,16], index: 6, kind: input, shape index: {}]
  %s7 = inlined_call_operand.vmem [shape: f32[16,7], index: 7, kind: input, shape index: {}]
  %s8 = inlined_call_operand.vmem [shape: f32[1,7], index: 8, kind: input, shape index: {}]
  %s9 = inlined_call_operand.hbm [shape: f32[2,7], index: 9, kind: output, shape index: {}]
  %s10 = sld [smem:[#allocation0]]
  $region50: #{tpu_custom_call.1} parent=0
    _
  %s12 = ssub.s32 1, %s10
  %s13 = scalar_select 0, %s12, %s10
  $region1: #{tpu_custom_call.1} parent=0
    #allocation2 [shape = 'u8[1024]{0}', space=vmem, size = 0x400, scoped, tag = 'input window, operand 4, single buffered']
    #allocation3 [shape = 's32[1]{0}', space=sflag, size = 0x4, scoped, tag = 'scoped memory for tpu_custom_call.1']
    #allocation4 [shape = 's32[1]{0}', space=sflag, size = 0x4, scoped, tag = 'scoped memory for tpu_custom_call.1']
    #allocation5 [shape = 'u8[1024]{0}', space=vmem, size = 0x400, scoped, tag = 'output window, operand 0, single buffered']
    %14 = vsyncpa [#allocation3], 0
    %15 = vsyncpa [#allocation4], 0
    // Predicated region
    $region2: #{tpu_custom_call.1} parent=1 // pred_check
      _
    $region3: #{tpu_custom_call.1} parent=1 // pred_check_branch
      %17 = sbr.rel (0) target = $region5
    $region4: #{tpu_custom_call.1} parent=1 // pred_region
      _
    $region5: #{tpu_custom_call.1} parent=1 // pred_fallthru
      _
    // Predicated region
    $region6: #{tpu_custom_call.1} parent=1 // pred_check
      _
    $region7: #{tpu_custom_call.1} parent=1 // pred_check_branch
      %19 = sbr.rel (0) target = $region9
    $region8: #{tpu_custom_call.1} parent=1 // pred_region
      _
    $region9: #{tpu_custom_call.1} parent=1 // pred_fallthru
      _
    // Predicated region
    $region10: #{tpu_custom_call.1} parent=1 // pred_check
      _
    $region11: #{tpu_custom_call.1} parent=1 // pred_check_branch
      %21 = sbr.rel (0) target = $region13
    $region12: #{tpu_custom_call.1} parent=1 // pred_region
      _
    $region13: #{tpu_custom_call.1} parent=1 // pred_fallthru
      _
    // Predicated region
    $region14: #{tpu_custom_call.1} parent=1 // pred_check
      _
    $region15: #{tpu_custom_call.1} parent=1 // pred_check_branch
      %23 = sbr.rel (0) target = $region17
    $region16: #{tpu_custom_call.1} parent=1 // pred_region
      _
    $region17: #{tpu_custom_call.1} parent=1 // pred_fallthru
      _
    // Predicated region
    $region18: #{tpu_custom_call.1} parent=1 // pred_check
      _
    $region19: #{tpu_custom_call.1} parent=1 // pred_check_branch
      %25 = sbr.rel (0) target = $region21
    $region20: #{tpu_custom_call.1} parent=1 // pred_region
      %s27 = ssub.s32 32, 32
      %28 = vsyncadd [#allocation3], %s27
      %s30 = sshll.u32 [#allocation2], 4
      %s31 = int_to_ptr.vmem [resolvable:$true] %s30
      %33 = dma.hbm_to_vmem [thread:$0]  %s4, 32, %s31, [#allocation3]
    $region21: #{tpu_custom_call.1} parent=1 // pred_fallthru
      _
    // Predicated region
    $region22: #{tpu_custom_call.1} parent=1 // pred_check
      _
    $region23: #{tpu_custom_call.1} parent=1 // pred_check_branch
      %35 = sbr.rel (0) target = $region25
    $region24: #{tpu_custom_call.1} parent=1 // pred_region
      _
    $region25: #{tpu_custom_call.1} parent=1 // pred_fallthru
      _
    // Predicated region
    $region26: #{tpu_custom_call.1} parent=1 // pred_check
      _
    $region27: #{tpu_custom_call.1} parent=1 // pred_check_branch
      %37 = sbr.rel (0) target = $region29
    $region28: #{tpu_custom_call.1} parent=1 // pred_region
      _
    $region29: #{tpu_custom_call.1} parent=1 // pred_fallthru
      _
    // Predicated region
    $region30: #{tpu_custom_call.1} parent=1 // pred_check
      _
    $region31: #{tpu_custom_call.1} parent=1 // pred_check_branch
      %39 = sbr.rel (0) target = $region33
    $region32: #{tpu_custom_call.1} parent=1 // pred_region
      _
    $region33: #{tpu_custom_call.1} parent=1 // pred_fallthru
      _
    // Predicated region
    $region34: #{tpu_custom_call.1} parent=1 // pred_check
      _
    $region35: #{tpu_custom_call.1} parent=1 // pred_check_branch
      %41 = sbr.rel (0) target = $region37
    $region36: #{tpu_custom_call.1} parent=1 // pred_region
      _
    $region37: #{tpu_custom_call.1} parent=1 // pred_fallthru
      _
    // Predicated region
    $region38: #{tpu_custom_call.1} parent=1 // pred_check
      _
    $region39: #{tpu_custom_call.1} parent=1 // pred_check_branch
      %43 = sbr.rel (0) target = $region41
    $region40: #{tpu_custom_call.1} parent=1 // pred_region
      %44 = dma.done [#allocation3], 32
    $region41: #{tpu_custom_call.1} parent=1 // pred_fallthru
      _
    %v45 = vld [vmem:[%s0] sm:$0x3]
    %v46 = vld [vmem:[%s3] sm:$0xff]
    %v47 = vld [vmem:[%s3 + $0x8] sm:$0x3]
    %v48 = vld [vmem:[%s1] sm:$0x3]
    %v49 = vld [vmem:[#allocation2] sm:$0x3]
    %vm50 = vcmask 15360
    %v52 = vsel %vm50, %v48, 0
    %vm54 = vcmask 1041408
    %v56 = vsel %vm54, %v49, 0
    %58 = vmatprep.subr.mxu0 0.0
    %59 = vmatpush1.msra.mxu0 %v56
    %60 = vmatprep.subr.mxu0 0.0
    %61 = vmatpush1.msra.mxu0 0.0
    %62 = vmatprep.subr.mxu0 0.0
    %63 = vmatpush1.msra.mxu0 0.0
    %64 = vmatprep.subr.mxu0 0.0
    %65 = vmatpush1.msra.mxu0 0.0
    %66 = vmatprep.subr.mxu0 0.0
    %67 = vmatpush1.msra.mxu0 0.0
    %68 = vmatprep.subr.mxu0 0.0
    %69 = vmatpush1.msra.mxu0 0.0
    %70 = vmatprep.subr.mxu0 0.0
    %71 = vmatpush1.msra.mxu0 0.0
    %72 = vmatprep.subr.mxu0 0.0
    %73 = vmatpush1.msra.mxu0 0.0
    %74 = vmatprep.subr.mxu0 0.0
    %75 = vmatpush1.msra.mxu0 0.0
    %76 = vmatprep.subr.mxu0 0.0
    %77 = vmatpush1.msra.mxu0 0.0
    %78 = vmatprep.subr.mxu0 0.0
    %79 = vmatpush1.msra.mxu0 0.0
    %80 = vmatprep.subr.mxu0 0.0
    %81 = vmatpush1.msra.mxu0 0.0
    %82 = vmatprep.subr.mxu0 0.0
    %83 = vmatpush1.msra.mxu0 0.0
    %84 = vmatprep.subr.mxu0 0.0
    %85 = vmatpush1.msra.mxu0 0.0
    %86 = vmatprep.subr.mxu0 0.0
    %87 = vmatpush1.msra.mxu0 0.0
    %88 = vmatprep.subr.mxu0 0.0
    %89 = vmatpush1.msra.mxu0 0.0
    %90 = vmatprep.subr.mxu0 0.0
    %91 = vmatpush1.msra.mxu0 0.0
    %92 = vmatprep.subr.mxu0 0.0
    %93 = vmatpush1.msra.mxu0 0.0
    %94 = vmatprep.subr.mxu0 0.0
    %95 = vmatpush1.msra.mxu0 0.0
    %96 = vmatprep.subr.mxu0 0.0
    %97 = vmatpush1.msra.mxu0 0.0
    %98 = vmatprep.subr.mxu0 0.0
    %99 = vmatpush1.msra.mxu0 0.0
    %100 = vmatprep.subr.mxu0 0.0
    %101 = vmatpush1.msra.mxu0 0.0
    %102 = vmatprep.subr.mxu0 0.0
    %103 = vmatpush1.msra.mxu0 0.0
    %104 = vmatprep.subr.mxu0 0.0
    %105 = vmatpush1.msra.mxu0 0.0
    %106 = vmatprep.subr.mxu0 0.0
    %107 = vmatpush1.msra.mxu0 0.0
    %108 = vmatprep.subr.mxu0 0.0
    %109 = vmatpush1.msra.mxu0 0.0
    %110 = vmatprep.subr.mxu0 0.0
    %111 = vmatpush1.msra.mxu0 0.0
    %112 = vmatprep.subr.mxu0 0.0
    %113 = vmatpush1.msra.mxu0 0.0
    %114 = vmatprep.subr.mxu0 0.0
    %115 = vmatpush1.msra.mxu0 0.0
    %116 = vmatprep.subr.mxu0 0.0
    %117 = vmatpush1.msra.mxu0 0.0
    %118 = vmatprep.subr.mxu0 0.0
    %119 = vmatpush1.msra.mxu0 0.0
    %120 = vmatprep.subr.mxu0 0.0
    %121 = vmatpush1.msra.mxu0 0.0
    %122 = vmatprep.mubr.f32.mxu0 0.0
    %123 = vmatmul.mubr.f32.gmra.mrb[0].mxu0 %v52
    %v124 = vpop.f32.mrb[0].mxu0
    %v125 = vadd.f32 0.0, %v124
    %v126 = vpop.f32.mrb[0].mxu0
    %127 = vdwg.mxu0
    %vm128 = vcmask 80896
    %v130 = vsel %vm128, %v45, 0
    %v133 = vsel %vm54, %v47, 0
    %135 = vmatprep.subr.mxu0 0.0
    %136 = vmatpush1.msra.mxu0 %v46
    %137 = vmatprep.subr.mxu0 0.0
    %138 = vmatpush1.msra.mxu0 %v133
    %139 = vmatprep.subr.mxu0 0.0
    %140 = vmatpush1.msra.mxu0 0.0
    %141 = vmatprep.subr.mxu0 0.0
    %142 = vmatpush1.msra.mxu0 0.0
    %143 = vmatprep.subr.mxu0 0.0
    %144 = vmatpush1.msra.mxu0 0.0
    %145 = vmatprep.subr.mxu0 0.0
    %146 = vmatpush1.msra.mxu0 0.0
    %147 = vmatprep.subr.mxu0 0.0
    %148 = vmatpush1.msra.mxu0 0.0
    %149 = vmatprep.subr.mxu0 0.0
    %150 = vmatpush1.msra.mxu0 0.0
    %151 = vmatprep.subr.mxu0 0.0
    %152 = vmatpush1.msra.mxu0 0.0
    %153 = vmatprep.subr.mxu0 0.0
    %154 = vmatpush1.msra.mxu0 0.0
    %155 = vmatprep.subr.mxu0 0.0
    %156 = vmatpush1.msra.mxu0 0.0
    %157 = vmatprep.subr.mxu0 0.0
    %158 = vmatpush1.msra.mxu0 0.0
    %159 = vmatprep.subr.mxu0 0.0
    %160 = vmatpush1.msra.mxu0 0.0
    %161 = vmatprep.subr.mxu0 0.0
    %162 = vmatpush1.msra.mxu0 0.0
    %163 = vmatprep.subr.mxu0 0.0
    %164 = vmatpush1.msra.mxu0 0.0
    %165 = vmatprep.subr.mxu0 0.0
    %166 = vmatpush1.msra.mxu0 0.0
    %167 = vmatprep.subr.mxu0 0.0
    %168 = vmatpush1.msra.mxu0 0.0
    %169 = vmatprep.subr.mxu0 0.0
    %170 = vmatpush1.msra.mxu0 0.0
    %171 = vmatprep.subr.mxu0 0.0
    %172 = vmatpush1.msra.mxu0 0.0
    %173 = vmatprep.subr.mxu0 0.0
    %174 = vmatpush1.msra.mxu0 0.0
    %175 = vmatprep.subr.mxu0 0.0
    %176 = vmatpush1.msra.mxu0 0.0
    %177 = vmatprep.subr.mxu0 0.0
    %178 = vmatpush1.msra.mxu0 0.0
    %179 = vmatprep.subr.mxu0 0.0
    %180 = vmatpush1.msra.mxu0 0.0
    %181 = vmatprep.subr.mxu0 0.0
    %182 = vmatpush1.msra.mxu0 0.0
    %183 = vmatprep.subr.mxu0 0.0
    %184 = vmatpush1.msra.mxu0 0.0
    %185 = vmatprep.subr.mxu0 0.0
    %186 = vmatpush1.msra.mxu0 0.0
    %187 = vmatprep.subr.mxu0 0.0
    %188 = vmatpush1.msra.mxu0 0.0
    %189 = vmatprep.subr.mxu0 0.0
    %190 = vmatpush1.msra.mxu0 0.0
    %191 = vmatprep.subr.mxu0 0.0
    %192 = vmatpush1.msra.mxu0 0.0
    %193 = vmatprep.subr.mxu0 0.0
    %194 = vmatpush1.msra.mxu0 0.0
    %195 = vmatprep.subr.mxu0 0.0
    %196 = vmatpush1.msra.mxu0 0.0
    %197 = vmatprep.subr.mxu0 0.0
    %198 = vmatpush1.msra.mxu0 0.0
    %199 = vmatprep.mubr.f32.mxu0 0.0
    %200 = vmatmul.mubr.f32.gmra.mrb[0].mxu0 %v130
    %v201 = vpop.f32.mrb[0].mxu0
    %v202 = vadd.f32 %v125, %v201
    %v203 = vpop.f32.mrb[0].mxu0
    %204 = vdwg.mxu0
    %v205 = vld [vmem:[%s2] sm:$0x3]
    %v206 = vld [vmem:[%s5] sm:$0xff]
    %vm207 = vcmask 64512
    %v209 = vsel %vm207, %v205, 0
    %211 = vmatprep.subr.mxu0 0.0
    %212 = vmatpush1.msra.mxu0 %v206
    %213 = vmatprep.subr.mxu0 0.0
    %214 = vmatpush1.msra.mxu0 0.0
    %215 = vmatprep.subr.mxu0 0.0
    %216 = vmatpush1.msra.mxu0 0.0
    %217 = vmatprep.subr.mxu0 0.0
    %218 = vmatpush1.msra.mxu0 0.0
    %219 = vmatprep.subr.mxu0 0.0
    %220 = vmatpush1.msra.mxu0 0.0
    %221 = vmatprep.subr.mxu0 0.0
    %222 = vmatpush1.msra.mxu0 0.0
    %223 = vmatprep.subr.mxu0 0.0
    %224 = vmatpush1.msra.mxu0 0.0
    %225 = vmatprep.subr.mxu0 0.0
    %226 = vmatpush1.msra.mxu0 0.0
    %227 = vmatprep.subr.mxu0 0.0
    %228 = vmatpush1.msra.mxu0 0.0
    %229 = vmatprep.subr.mxu0 0.0
    %230 = vmatpush1.msra.mxu0 0.0
    %231 = vmatprep.subr.mxu0 0.0
    %232 = vmatpush1.msra.mxu0 0.0
    %233 = vmatprep.subr.mxu0 0.0
    %234 = vmatpush1.msra.mxu0 0.0
    %235 = vmatprep.subr.mxu0 0.0
    %236 = vmatpush1.msra.mxu0 0.0
    %237 = vmatprep.subr.mxu0 0.0
    %238 = vmatpush1.msra.mxu0 0.0
    %239 = vmatprep.subr.mxu0 0.0
    %240 = vmatpush1.msra.mxu0 0.0
    %241 = vmatprep.subr.mxu0 0.0
    %242 = vmatpush1.msra.mxu0 0.0
    %243 = vmatprep.subr.mxu0 0.0
    %244 = vmatpush1.msra.mxu0 0.0
    %245 = vmatprep.subr.mxu0 0.0
    %246 = vmatpush1.msra.mxu0 0.0
    %247 = vmatprep.subr.mxu0 0.0
    %248 = vmatpush1.msra.mxu0 0.0
    %249 = vmatprep.subr.mxu0 0.0
    %250 = vmatpush1.msra.mxu0 0.0
    %251 = vmatprep.subr.mxu0 0.0
    %252 = vmatpush1.msra.mxu0 0.0
    %253 = vmatprep.subr.mxu0 0.0
    %254 = vmatpush1.msra.mxu0 0.0
    %255 = vmatprep.subr.mxu0 0.0
    %256 = vmatpush1.msra.mxu0 0.0
    %257 = vmatprep.subr.mxu0 0.0
    %258 = vmatpush1.msra.mxu0 0.0
    %259 = vmatprep.subr.mxu0 0.0
    %260 = vmatpush1.msra.mxu0 0.0
    %261 = vmatprep.subr.mxu0 0.0
    %262 = vmatpush1.msra.mxu0 0.0
    %263 = vmatprep.subr.mxu0 0.0
    %264 = vmatpush1.msra.mxu0 0.0
    %265 = vmatprep.subr.mxu0 0.0
    %266 = vmatpush1.msra.mxu0 0.0
    %267 = vmatprep.subr.mxu0 0.0
    %268 = vmatpush1.msra.mxu0 0.0
    %269 = vmatprep.subr.mxu0 0.0
    %270 = vmatpush1.msra.mxu0 0.0
    %271 = vmatprep.subr.mxu0 0.0
    %272 = vmatpush1.msra.mxu0 0.0
    %273 = vmatprep.subr.mxu0 0.0
    %274 = vmatpush1.msra.mxu0 0.0
    %275 = vmatprep.mubr.f32.mxu0 0.0
    %276 = vmatmul.mubr.f32.gmra.mrb[0].mxu0 %v209
    %v277 = vpop.f32.mrb[0].mxu0
    %v278 = vadd.f32 0.0, %v277
    %v279 = vpop.f32.mrb[0].mxu0
    %280 = vdwg.mxu0
    %v281 = vadd.f32 %v202, %v278
    %v282 = vld [vmem:[%s6] sm:$0x1]
    %v284 = vlaneseq
    %v285 = vshrl.u32 %v284, 7
    %v286 = vsub.s32 0, %v285
    %v287 = vrot.slane %v282, %v286
    %v289 = vadd.f32 %v281, %v287
    %v290 = vmax.f32 %v289, 0.0
    %v291 = vld [vmem:[%s7] sm:$0xff]
    %v292 = vld [vmem:[%s7 + $0x8] sm:$0xff]
    %v293 = vld [vmem:[%s8] sm:$0x1]
    %v295 = vlaneseq
    %v296 = vshrl.u32 %v295, 7
    %v297 = vsub.s32 0, %v296
    %v298 = vrot.slane %v293, %v297
    %vm300 = vcmask 130048
    %v302 = vsel %vm300, %v290, 0
    %304 = vmatprep.subr.mxu0 0.0
    %305 = vmatpush1.msra.mxu0 %v291
    %306 = vmatprep.subr.mxu0 0.0
    %307 = vmatpush1.msra.mxu0 %v292
    %308 = vmatprep.subr.mxu0 0.0
    %309 = vmatpush1.msra.mxu0 0.0
    %310 = vmatprep.subr.mxu0 0.0
    %311 = vmatpush1.msra.mxu0 0.0
    %312 = vmatprep.subr.mxu0 0.0
    %313 = vmatpush1.msra.mxu0 0.0
    %314 = vmatprep.subr.mxu0 0.0
    %315 = vmatpush1.msra.mxu0 0.0
    %316 = vmatprep.subr.mxu0 0.0
    %317 = vmatpush1.msra.mxu0 0.0
    %318 = vmatprep.subr.mxu0 0.0
    %319 = vmatpush1.msra.mxu0 0.0
    %320 = vmatprep.subr.mxu0 0.0
    %321 = vmatpush1.msra.mxu0 0.0
    %322 = vmatprep.subr.mxu0 0.0
    %323 = vmatpush1.msra.mxu0 0.0
    %324 = vmatprep.subr.mxu0 0.0
    %325 = vmatpush1.msra.mxu0 0.0
    %326 = vmatprep.subr.mxu0 0.0
    %327 = vmatpush1.msra.mxu0 0.0
    %328 = vmatprep.subr.mxu0 0.0
    %329 = vmatpush1.msra.mxu0 0.0
    %330 = vmatprep.subr.mxu0 0.0
    %331 = vmatpush1.msra.mxu0 0.0
    %332 = vmatprep.subr.mxu0 0.0
    %333 = vmatpush1.msra.mxu0 0.0
    %334 = vmatprep.subr.mxu0 0.0
    %335 = vmatpush1.msra.mxu0 0.0
    %336 = vmatprep.subr.mxu0 0.0
    %337 = vmatpush1.msra.mxu0 0.0
    %338 = vmatprep.subr.mxu0 0.0
    %339 = vmatpush1.msra.mxu0 0.0
    %340 = vmatprep.subr.mxu0 0.0
    %341 = vmatpush1.msra.mxu0 0.0
    %342 = vmatprep.subr.mxu0 0.0
    %343 = vmatpush1.msra.mxu0 0.0
    %344 = vmatprep.subr.mxu0 0.0
    %345 = vmatpush1.msra.mxu0 0.0
    %346 = vmatprep.subr.mxu0 0.0
    %347 = vmatpush1.msra.mxu0 0.0
    %348 = vmatprep.subr.mxu0 0.0
    %349 = vmatpush1.msra.mxu0 0.0
    %350 = vmatprep.subr.mxu0 0.0
    %351 = vmatpush1.msra.mxu0 0.0
    %352 = vmatprep.subr.mxu0 0.0
    %353 = vmatpush1.msra.mxu0 0.0
    %354 = vmatprep.subr.mxu0 0.0
    %355 = vmatpush1.msra.mxu0 0.0
    %356 = vmatprep.subr.mxu0 0.0
    %357 = vmatpush1.msra.mxu0 0.0
    %358 = vmatprep.subr.mxu0 0.0
    %359 = vmatpush1.msra.mxu0 0.0
    %360 = vmatprep.subr.mxu0 0.0
    %361 = vmatpush1.msra.mxu0 0.0
    %362 = vmatprep.subr.mxu0 0.0
    %363 = vmatpush1.msra.mxu0 0.0
    %364 = vmatprep.subr.mxu0 0.0
    %365 = vmatpush1.msra.mxu0 0.0
    %366 = vmatprep.subr.mxu0 0.0
    %367 = vmatpush1.msra.mxu0 0.0
    %368 = vmatprep.mubr.f32.mxu0 0.0
    %369 = vmatmul.mubr.f32.gmra.mrb[0].mxu0 %v302
    %v370 = vpop.f32.mrb[0].mxu0
    %v371 = vadd.f32 %v298, %v370
    %v372 = vpop.f32.mrb[0].mxu0
    %373 = vdwg.mxu0
    %vm374 = vcmask 50176
    %375 = vst.msk [vmem:[#allocation5] sm:$0x3] %vm374, %v371
    // Predicated region
    $region42: #{tpu_custom_call.1} parent=1 // pred_check
      _
    $region43: #{tpu_custom_call.1} parent=1 // pred_check_branch
      %377 = sbr.rel (0) target = $region45
    $region44: #{tpu_custom_call.1} parent=1 // pred_region
      %s379 = ssub.s32 32, 32
      %380 = vsyncadd [#allocation4], %s379
      %s382 = sshll.u32 [#allocation5], 4
      %s383 = int_to_ptr.vmem [resolvable:$true] %s382
      %385 = dma.vmem_to_hbm [thread:$0]  %s383, 32, %s9, [#allocation4]
    $region45: #{tpu_custom_call.1} parent=1 // pred_fallthru
      _
    // Predicated region
    $region46: #{tpu_custom_call.1} parent=1 // pred_check
      _
    $region47: #{tpu_custom_call.1} parent=1 // pred_check_branch
      %387 = sbr.rel (0) target = $region49
    $region48: #{tpu_custom_call.1} parent=1 // pred_region
      %388 = dma.done [#allocation4], 32
    $region49: #{tpu_custom_call.1} parent=1 // pred_fallthru
      _
    %389 = vsyncpa [#allocation3], 1
    %390 = vsyncpa [#allocation4], 1

</llo_original>
